<compile_context>
chip_gen: v7x
topology: tpu7x:2x2x1
jax: 0.10.0
libtpu: 0.0.40
codegen_flags: <defaults>
</compile_context>

<pallas_src>
import numpy as np
import jax
import jax.numpy as jnp
from jax import lax
from jax.experimental import pallas as pl
from jax.experimental.pallas import tpu as pltpu

KSIZE = 21                 # Conv2d kernel size
PAD = 10                   # ReflectionPad2d(10)
_SMALL_BLOCK_UNROLL = 8    # below this batch-block size, skip the relayout


def _gaussian_1d(sigma: float = 2.0, size: int = KSIZE) -> np.ndarray:
    """1-D factor of scipy.ndimage.gaussian_filter(delta_21x21, sigma=2)."""
    radius = int(4.0 * sigma + 0.5)          # = 8 for sigma = 2 (scipy truncate=4)
    x = np.arange(-radius, radius + 1, dtype=np.float64)
    phi = np.exp(-0.5 / (sigma * sigma) * x * x)
    phi /= phi.sum()
    k = np.zeros((size,), np.float64)
    c = size // 2
    k[c - radius:c + radius + 1] = phi
    return k


def _reflect(p: int, L: int) -> int:
    """ReflectionPad index map (no edge repeat); valid while overhang <= L-1."""
    if p < 0:
        return -p
    if p >= L:
        return 2 * (L - 1) - p
    return p


def _reflect_corr_matrix(L: int, k1d: np.ndarray, pad: int) -> np.ndarray:
    """(L, L) matrix M with (M @ v) == valid 1-D corr(reflect_pad(v, pad), k1d)."""
    M = np.zeros((L, L), np.float64)
    for i in range(L):
        for d in range(k1d.shape[0]):
            M[i, _reflect(i + d - pad, L)] += k1d[d]
    return M


def _gauss_kernel(th_ref, tw_ref, x_ref, o_ref):
    """out[b] = Th @ x[b] @ Tw for every image in this batch block (MXU)."""
    bn, hh, ww = x_ref.shape
    th = th_ref[...]                          # (H, H)
    tw = tw_ref[...]                          # (W, W), pre-transposed for x @ Tw
    x = x_ref[...].astype(jnp.float32)        # (bn, H, W)

    # Horizontal (reflect-pad + 21-tap along W) pass: one batch-fused matmul.
    yh = jnp.dot(x.reshape(bn * hh, ww), tw,
                 preferred_element_type=jnp.float32).reshape(bn, hh, ww)

    if bn <= _SMALL_BLOCK_UNROLL:
        # Tiny batch block: a short static unroll of per-image dots is cheaper
        # than the in-VMEM relayout below, and code size stays bounded.
        for b in range(bn):
            o_ref[b] = jnp.dot(th, yh[b],
                               preferred_element_type=jnp.float32
                               ).astype(o_ref.dtype)
    else:
        # Vertical (H) pass, batch-fused: transpose each image in VMEM (XLU),
        # run a single (bn*W, H) @ Th^T matmul, transpose back.
        yt = jnp.swapaxes(yh, 1, 2).reshape(bn * ww, hh)          # (bn*W, H)
        z = jnp.dot(yt, th.T, preferred_element_type=jnp.float32)  # (bn*W, H)
        out = jnp.swapaxes(z.reshape(bn, ww, hh), 1, 2)            # (bn, H, W)
        o_ref[...] = out.astype(o_ref.dtype)


def gaussian_layer(x: jnp.ndarray, *, sigma: float = 2.0, block_n=None) -> jnp.ndarray:
    """Forward pass of GaussianLayer.  x: (N, 1, H, W) -> (N, 1, H, W)."""
    N, C, H, W = x.shape
    assert C == 1, "GaussianLayer is single-channel (Conv2d(1, 1, 21))"
    assert H > PAD and W > PAD, "ReflectionPad2d(10) requires H, W > 10"

    # Fold (reflection pad + separable 21-tap correlation) into two constant
    # matrices, built once on the host at trace time.
    k1d = _gaussian_1d(sigma)
    th = jnp.asarray(_reflect_corr_matrix(H, k1d, PAD), jnp.float32)      # (H, H)
    tw = jnp.asarray(_reflect_corr_matrix(W, k1d, PAD).T, jnp.float32)    # (W, W)

    x3 = x[:, 0]                                                          # (N, H, W)

    itemsize = x.dtype.itemsize
    per_img_io = 2 * H * W * itemsize                 # in + out bytes per image/step
    if block_n is None:
        budget = 8 << 20                              # ~8 MiB in+out per grid step
        block_n = max(1, min(N, budget // max(per_img_io, 1)))
        # >=2 grid steps only pays off on 2-TensorCore chips (v7x megacore);
        # only halve the block when the halved block still moves >= 4 MiB per
        # step, so single-TC chips (v5e/v6e) don't eat extra per-step overhead.
        half = pl.cdiv(N, 2)
        if N >= 2 and half * per_img_io >= (4 << 20):
            block_n = min(block_n, half)
    block_n = int(max(1, min(block_n, N)))

    # Ragged last block is masked by Pallas (no host-side pad / output slice).
    grid = (pl.cdiv(N, block_n),)

    # Scoped-VMEM budget for this block plan (in/out double-buffered, f32
    # temporaries inside the kernel, factors double-buffered); stay under
    # v7x's 64 MiB physical VMEM.
    blk_elems = block_n * H * W
    vmem_est = (2 * 2 * blk_elems * itemsize
                + 4 * blk_elems * 4
                + 2 * (H * H + W * W) * 4)
    vmem_limit = int(min(64 << 20, max(32 << 20, int(vmem_est * 1.25))))

    out = pl.pallas_call(
        _gauss_kernel,
        out_shape=jax.ShapeDtypeStruct((N, H, W), x.dtype),
        grid=grid,
        in_specs=[
            pl.BlockSpec((H, H), lambda n: (0, 0)),               # Th (constant)
            pl.BlockSpec((W, W), lambda n: (0, 0)),               # Tw (constant)
            pl.BlockSpec((block_n, H, W), lambda n: (n, 0, 0)),   # image block
        ],
        out_specs=pl.BlockSpec((block_n, H, W), lambda n: (n, 0, 0)),
        compiler_params=pltpu.CompilerParams(
            dimension_semantics=("parallel",),
            vmem_limit_bytes=vmem_limit),
    )(th, tw, x3)
    return out[:, None, :, :]


def _reference(x: jnp.ndarray, sigma: float = 2.0) -> jnp.ndarray:
    """Pure-JAX reference: ReflectionPad2d(10) + valid 21x21 cross-correlation."""
    k1d = _gaussian_1d(sigma)
    w2d = jnp.asarray(np.outer(k1d, k1d), jnp.float32)[None, None]   # OIHW
    xpad = jnp.pad(x, ((0, 0), (0, 0), (PAD, PAD), (PAD, PAD)), mode="reflect")
    return lax.conv_general_dilated(
        xpad, w2d, window_strides=(1, 1), padding="VALID",
        dimension_numbers=("NCHW", "OIHW", "NCHW"),
        precision=lax.Precision.HIGHEST)


if __name__ == "__main__":
    key = jax.random.PRNGKey(0)
    x = jax.random.normal(key, (2, 1, 16, 16), dtype=jnp.float32)

    y = gaussian_layer(x)
    jax.block_until_ready(y)
    assert y.shape == (2, 1, 16, 16), y.shape

    y_ref = _reference(x)
    max_err = float(jnp.max(jnp.abs(y - y_ref)))
    mean_err = float(jnp.mean(jnp.abs(y - y_ref)))
    # Loose-ish tolerance: the in-kernel f32 dots may run at the MXU's
    # reduced (bf16-pass) precision; genuine bugs (wrong reflection index,
    # transposed factor, bad normalization) give errors >= 5e-2 / 1e-2.
    assert max_err < 5e-2 and mean_err < 1e-2, (max_err, mean_err)
    print("KERNEL_OK")
</pallas_src>

<mosaic_0001>
module attributes {stable_mosaic.version = 11 : i64} {
  func.func @_gauss_kernel(%arg0: i32, %arg1: memref<16x16xf32, #tpu.memory_space<vmem>>, %arg2: memref<16x16xf32, #tpu.memory_space<vmem>>, %arg3: memref<2x16x16xf32, #tpu.memory_space<vmem>>, %arg4: memref<2x16x16xf32, #tpu.memory_space<vmem>>) attributes {dimension_semantics = [#tpu.dimension_semantics<parallel>], iteration_bounds = array<i64: 1>, scalar_prefetch = 0 : i64, scratch_operands = 0 : i64, tpu.core_type = #tpu.core_type<tc>, window_params = [{pipeline_mode = #tpu.pipeline_mode<synchronous>, transform_indices = @transform_0, window_bounds = array<i64: 16, 16>}, {pipeline_mode = #tpu.pipeline_mode<synchronous>, transform_indices = @transform_1, window_bounds = array<i64: 16, 16>}, {transform_indices = @transform_2, window_bounds = array<i64: 2, 16, 16>}, {transform_indices = @transform_3, window_bounds = array<i64: 2, 16, 16>}]} {
    %c0 = arith.constant 0 : index
    %c0_0 = arith.constant 0 : index
    %0 = vector.load %arg1[%c0, %c0_0] : memref<16x16xf32, #tpu.memory_space<vmem>>, vector<16x16xf32>
    %c0_1 = arith.constant 0 : index
    %c0_2 = arith.constant 0 : index
    %1 = vector.load %arg2[%c0_1, %c0_2] : memref<16x16xf32, #tpu.memory_space<vmem>>, vector<16x16xf32>
    %c0_3 = arith.constant 0 : index
    %c0_4 = arith.constant 0 : index
    %c0_5 = arith.constant 0 : index
    %2 = vector.load %arg3[%c0_3, %c0_4, %c0_5] : memref<2x16x16xf32, #tpu.memory_space<vmem>>, vector<2x16x16xf32>
    %3 = vector.shape_cast %2 : vector<2x16x16xf32> to vector<32x16xf32>
    %cst = arith.constant dense<0.000000e+00> : vector<32x16xf32>
    %4 = tpu.matmul %3, %1, %cst {dimension_numbers = #tpu.dot_dimension_numbers<[1], [0], [0], [1], [0, 0, 1, 1], [], []>} : vector<32x16xf32>, vector<16x16xf32>, vector<32x16xf32> -> vector<32x16xf32>
    %5 = vector.shape_cast %4 : vector<32x16xf32> to vector<2x16x16xf32>
    %6 = vector.extract_strided_slice %5 {offsets = [0, 0, 0], sizes = [1, 16, 16], strides = [1, 1, 1]} : vector<2x16x16xf32> to vector<1x16x16xf32>
    %7 = vector.shape_cast %6 : vector<1x16x16xf32> to vector<16x16xf32>
    %cst_6 = arith.constant dense<0.000000e+00> : vector<16x16xf32>
    %8 = tpu.matmul %0, %7, %cst_6 {dimension_numbers = #tpu.dot_dimension_numbers<[1], [0], [0], [1], [0, 0, 1, 1], [], []>} : vector<16x16xf32>, vector<16x16xf32>, vector<16x16xf32> -> vector<16x16xf32>
    %c0_7 = arith.constant 0 : index
    %c0_8 = arith.constant 0 : index
    %c0_9 = arith.constant 0 : index
    %9 = vector.load %arg4[%c0_7, %c0_8, %c0_9] : memref<2x16x16xf32, #tpu.memory_space<vmem>>, vector<1x16x16xf32>
    %10 = vector.shape_cast %9 : vector<1x16x16xf32> to vector<16x16xf32>
    %11 = vector.shape_cast %8 : vector<16x16xf32> to vector<1x16x16xf32>
    tpu.vector_store %arg4[%c0_7, %c0_8, %c0_9], %11 {strides = array<i32>} : memref<2x16x16xf32, #tpu.memory_space<vmem>>, vector<1x16x16xf32>,
    %12 = vector.extract_strided_slice %5 {offsets = [1, 0, 0], sizes = [1, 16, 16], strides = [1, 1, 1]} : vector<2x16x16xf32> to vector<1x16x16xf32>
    %13 = vector.shape_cast %12 : vector<1x16x16xf32> to vector<16x16xf32>
    %cst_10 = arith.constant dense<0.000000e+00> : vector<16x16xf32>
    %14 = tpu.matmul %0, %13, %cst_10 {dimension_numbers = #tpu.dot_dimension_numbers<[1], [0], [0], [1], [0, 0, 1, 1], [], []>} : vector<16x16xf32>, vector<16x16xf32>, vector<16x16xf32> -> vector<16x16xf32>
    %c1 = arith.constant 1 : index
    %c0_11 = arith.constant 0 : index
    %c0_12 = arith.constant 0 : index
    %15 = vector.load %arg4[%c1, %c0_11, %c0_12] : memref<2x16x16xf32, #tpu.memory_space<vmem>>, vector<1x16x16xf32>
    %16 = vector.shape_cast %15 : vector<1x16x16xf32> to vector<16x16xf32>
    %17 = vector.shape_cast %14 : vector<16x16xf32> to vector<1x16x16xf32>
    tpu.vector_store %arg4[%c1, %c0_11, %c0_12], %17 {strides = array<i32>} : memref<2x16x16xf32, #tpu.memory_space<vmem>>, vector<1x16x16xf32>,
    return
  }
  func.func @transform_0(%arg0: i32) -> (i32, i32) {
    %c0_i32 = arith.constant 0 : i32
    %c0_i32_0 = arith.constant 0 : i32
    %c0_i32_1 = arith.constant 0 : i32
    return %c0_i32, %c0_i32_0 : i32, i32
  }
  func.func @transform_1(%arg0: i32) -> (i32, i32) {
    %c0_i32 = arith.constant 0 : i32
    %c0_i32_0 = arith.constant 0 : i32
    %c0_i32_1 = arith.constant 0 : i32
    return %c0_i32, %c0_i32_0 : i32, i32
  }
  func.func @transform_2(%arg0: i32) -> (i32, i32, i32) {
    %c0_i32 = arith.constant 0 : i32
    %c0_i32_0 = arith.constant 0 : i32
    %c0_i32_1 = arith.constant 0 : i32
    return %arg0, %c0_i32, %c0_i32_0 : i32, i32, i32
  }
  func.func @transform_3(%arg0: i32) -> (i32, i32, i32) {
    %c0_i32 = arith.constant 0 : i32
    %c0_i32_0 = arith.constant 0 : i32
    %c0_i32_1 = arith.constant 0 : i32
    return %arg0, %c0_i32, %c0_i32_0 : i32, i32, i32
  }
}

</mosaic_0001>

<llo_original>
// kernel: tpu_custom_call.1
$region0: #{tpu_custom_call.1}
  #allocation0 [shape = 'u32[]', space=smem, size = 0x4, offset = 0x4, fixed_abs, tag = 'smem constant byte address 0x4 - core index']
  #allocation1 [shape = 'u32[144,128]{1,0:T(1,128)}', space=vmem, size = 0x12000, scoped, tag = 'internal scratch']
  %s0 = inlined_call_operand.hbm [shape: f32[16,16], index: 0, kind: input, shape index: {}]
  %s1 = inlined_call_operand.hbm [shape: f32[16,16], index: 1, kind: input, shape index: {}]
  %s2 = inlined_call_operand.hbm [shape: f32[2,16,16], index: 2, kind: input, shape index: {}]
  %s3 = inlined_call_operand.hbm [shape: f32[2,16,16], index: 3, kind: output, shape index: {}]
  %s4 = sld [smem:[#allocation0]]
  $region34: #{tpu_custom_call.1} parent=0
    _
  %s6 = ssub.s32 1, %s4
  %s7 = scalar_select 0, %s6, %s4
  $region1: #{tpu_custom_call.1} parent=0
    #allocation2 [shape = 'u8[8192]{0}', space=vmem, size = 0x2000, scoped, tag = 'input window, operand 0, single buffered']
    #allocation3 [shape = 's32[1]{0}', space=sflag, size = 0x4, scoped, tag = 'scoped memory for tpu_custom_call.1']
    #allocation4 [shape = 's32[1]{0}', space=sflag, size = 0x4, scoped, tag = 'scoped memory for tpu_custom_call.1']
    #allocation5 [shape = 'u8[8192]{0}', space=vmem, size = 0x2000, scoped, tag = 'input window, operand 1, single buffered']
    #allocation6 [shape = 's32[1]{0}', space=sflag, size = 0x4, scoped, tag = 'scoped memory for tpu_custom_call.1']
    #allocation7 [shape = 'u8[16384]{0}', space=vmem, size = 0x4000, scoped, tag = 'input window, operand 2, single buffered']
    #allocation8 [shape = 'u8[16384]{0}', space=vmem, size = 0x4000, scoped, tag = 'output window, operand 0, single buffered']
    %8 = vsyncpa [#allocation3], 0
    %9 = vsyncpa [#allocation6], 0
    %10 = vsyncpa [#allocation4], 0
    // Predicated region
    $region2: #{tpu_custom_call.1} parent=1 // pred_check
      _
    $region3: #{tpu_custom_call.1} parent=1 // pred_check_branch
      %12 = sbr.rel (0) target = $region5
    $region4: #{tpu_custom_call.1} parent=1 // pred_region
      %s14 = ssub.s32 256, 256
      %15 = vsyncadd [#allocation3], %s14
      %s16 = sshll.u32 [#allocation2], 4
      %s17 = int_to_ptr.vmem [resolvable:$true] %s16
      %22 = dma.hbm_to_vmem [thread:$0]  %s0, 256, %s17, [#allocation3], 128, 128, 8
    $region5: #{tpu_custom_call.1} parent=1 // pred_fallthru
      _
    // Predicated region
    $region6: #{tpu_custom_call.1} parent=1 // pred_check
      _
    $region7: #{tpu_custom_call.1} parent=1 // pred_check_branch
      %24 = sbr.rel (0) target = $region9
    $region8: #{tpu_custom_call.1} parent=1 // pred_region
      %s26 = ssub.s32 256, 256
      %27 = vsyncadd [#allocation6], %s26
      %s28 = sshll.u32 [#allocation5], 4
      %s29 = int_to_ptr.vmem [resolvable:$true] %s28
      %34 = dma.hbm_to_vmem [thread:$0]  %s1, 256, %s29, [#allocation6], 128, 128, 8
    $region9: #{tpu_custom_call.1} parent=1 // pred_fallthru
      _
    // Predicated region
    $region10: #{tpu_custom_call.1} parent=1 // pred_check
      _
    $region11: #{tpu_custom_call.1} parent=1 // pred_check_branch
      %36 = sbr.rel (0) target = $region13
    $region12: #{tpu_custom_call.1} parent=1 // pred_region
      %s38 = ssub.s32 512, 512
      %39 = vsyncadd [#allocation6], %s38
      %s40 = sshll.u32 [#allocation7], 4
      %s41 = int_to_ptr.vmem [resolvable:$true] %s40
      %46 = dma.hbm_to_vmem [thread:$0]  %s2, 512, %s41, [#allocation6], 128, 128, 8
    $region13: #{tpu_custom_call.1} parent=1 // pred_fallthru
      _
    // Predicated region
    $region14: #{tpu_custom_call.1} parent=1 // pred_check
      _
    $region15: #{tpu_custom_call.1} parent=1 // pred_check_branch
      %48 = sbr.rel (0) target = $region17
    $region16: #{tpu_custom_call.1} parent=1 // pred_region
      %49 = dma.done [#allocation3], 256
    $region17: #{tpu_custom_call.1} parent=1 // pred_fallthru
      _
    // Predicated region
    $region18: #{tpu_custom_call.1} parent=1 // pred_check
      _
    $region19: #{tpu_custom_call.1} parent=1 // pred_check_branch
      %51 = sbr.rel (0) target = $region21
    $region20: #{tpu_custom_call.1} parent=1 // pred_region
      %52 = dma.done [#allocation6], 256
    $region21: #{tpu_custom_call.1} parent=1 // pred_fallthru
      _
    // Predicated region
    $region22: #{tpu_custom_call.1} parent=1 // pred_check
      _
    $region23: #{tpu_custom_call.1} parent=1 // pred_check_branch
      %54 = sbr.rel (0) target = $region25
    $region24: #{tpu_custom_call.1} parent=1 // pred_region
      %55 = dma.done [#allocation6], 512
    $region25: #{tpu_custom_call.1} parent=1 // pred_fallthru
      _
    %v56 = vld [vmem:[#allocation2] sm:$0xff]
    %v57 = vld [vmem:[#allocation2 + $0x8] sm:$0xff]
    %v58 = vld [vmem:[#allocation5] sm:$0xff]
    %v59 = vld [vmem:[#allocation5 + $0x8] sm:$0xff]
    %v60 = vld [vmem:[#allocation7] sm:$0xff]
    %v61 = vld [vmem:[#allocation7 + $0x8] sm:$0xff]
    %v62 = vld [vmem:[#allocation7 + $0x10] sm:$0xff]
    %v63 = vld [vmem:[#allocation7 + $0x18] sm:$0xff]
    %vm64 = vcmask 130048
    %v66 = vsel %vm64, %v60, 0
    %v69 = vsel %vm64, %v61, 0
    %v72 = vsel %vm64, %v62, 0
    %v75 = vsel %vm64, %v63, 0
    %77 = vmatprep.subr.mxu0 0.0
    %78 = vmatpush1.msra.mxu0 %v58
    %79 = vmatprep.subr.mxu0 0.0
    %80 = vmatpush1.msra.mxu0 %v59
    %81 = vmatprep.subr.mxu0 0.0
    %82 = vmatpush1.msra.mxu0 0.0
    %83 = vmatprep.subr.mxu0 0.0
    %84 = vmatpush1.msra.mxu0 0.0
    %85 = vmatprep.subr.mxu0 0.0
    %86 = vmatpush1.msra.mxu0 0.0
    %87 = vmatprep.subr.mxu0 0.0
    %88 = vmatpush1.msra.mxu0 0.0
    %89 = vmatprep.subr.mxu0 0.0
    %90 = vmatpush1.msra.mxu0 0.0
    %91 = vmatprep.subr.mxu0 0.0
    %92 = vmatpush1.msra.mxu0 0.0
    %93 = vmatprep.subr.mxu0 0.0
    %94 = vmatpush1.msra.mxu0 0.0
    %95 = vmatprep.subr.mxu0 0.0
    %96 = vmatpush1.msra.mxu0 0.0
    %97 = vmatprep.subr.mxu0 0.0
    %98 = vmatpush1.msra.mxu0 0.0
    %99 = vmatprep.subr.mxu0 0.0
    %100 = vmatpush1.msra.mxu0 0.0
    %101 = vmatprep.subr.mxu0 0.0
    %102 = vmatpush1.msra.mxu0 0.0
    %103 = vmatprep.subr.mxu0 0.0
    %104 = vmatpush1.msra.mxu0 0.0
    %105 = vmatprep.subr.mxu0 0.0
    %106 = vmatpush1.msra.mxu0 0.0
    %107 = vmatprep.subr.mxu0 0.0
    %108 = vmatpush1.msra.mxu0 0.0
    %109 = vmatprep.subr.mxu0 0.0
    %110 = vmatpush1.msra.mxu0 0.0
    %111 = vmatprep.subr.mxu0 0.0
    %112 = vmatpush1.msra.mxu0 0.0
    %113 = vmatprep.subr.mxu0 0.0
    %114 = vmatpush1.msra.mxu0 0.0
    %115 = vmatprep.subr.mxu0 0.0
    %116 = vmatpush1.msra.mxu0 0.0
    %117 = vmatprep.subr.mxu0 0.0
    %118 = vmatpush1.msra.mxu0 0.0
    %119 = vmatprep.subr.mxu0 0.0
    %120 = vmatpush1.msra.mxu0 0.0
    %121 = vmatprep.subr.mxu0 0.0
    %122 = vmatpush1.msra.mxu0 0.0
    %123 = vmatprep.subr.mxu0 0.0
    %124 = vmatpush1.msra.mxu0 0.0
    %125 = vmatprep.subr.mxu0 0.0
    %126 = vmatpush1.msra.mxu0 0.0
    %127 = vmatprep.subr.mxu0 0.0
    %128 = vmatpush1.msra.mxu0 0.0
    %129 = vmatprep.subr.mxu0 0.0
    %130 = vmatpush1.msra.mxu0 0.0
    %131 = vmatprep.subr.mxu0 0.0
    %132 = vmatpush1.msra.mxu0 0.0
    %133 = vmatprep.subr.mxu0 0.0
    %134 = vmatpush1.msra.mxu0 0.0
    %135 = vmatprep.subr.mxu0 0.0
    %136 = vmatpush1.msra.mxu0 0.0
    %137 = vmatprep.subr.mxu0 0.0
    %138 = vmatpush1.msra.mxu0 0.0
    %139 = vmatprep.subr.mxu0 0.0
    %140 = vmatpush1.msra.mxu0 0.0
    %141 = vmatprep.mubr.f32.mxu0 0.0
    %142 = vmatmul.mubr.f32.gmra.mrb[0].mxu0 %v66
    %v143 = vpop.f32.mrb[0].mxu0
    %v144 = vadd.f32 0.0, %v143
    %v145 = vpop.f32.mrb[0].mxu0
    %146 = vmatprep.mubr.f32.mxu0 0.0
    %147 = vmatmul.mubr.f32.gmra.mrb[0].mxu0 %v69
    %v148 = vpop.f32.mrb[0].mxu0
    %v149 = vadd.f32 0.0, %v148
    %v150 = vpop.f32.mrb[0].mxu0
    %151 = vmatprep.mubr.f32.mxu0 0.0
    %152 = vmatmul.mubr.f32.gmra.mrb[0].mxu0 %v72
    %v153 = vpop.f32.mrb[0].mxu0
    %v154 = vadd.f32 0.0, %v153
    %v155 = vpop.f32.mrb[0].mxu0
    %156 = vmatprep.mubr.f32.mxu0 0.0
    %157 = vmatmul.mubr.f32.gmra.mrb[0].mxu0 %v75
    %v158 = vpop.f32.mrb[0].mxu0
    %v159 = vadd.f32 0.0, %v158
    %v160 = vpop.f32.mrb[0].mxu0
    %161 = vdwg.mxu0
    %v163 = vsel %vm64, %v56, 0
    %v166 = vsel %vm64, %v57, 0
    %168 = vmatprep.subr.mxu0 0.0
    %169 = vmatpush1.msra.mxu0 %v144
    %170 = vmatprep.subr.mxu0 0.0
    %171 = vmatpush1.msra.mxu0 %v149
    %172 = vmatprep.subr.mxu0 0.0
    %173 = vmatpush1.msra.mxu0 0.0
    %174 = vmatprep.subr.mxu0 0.0
    %175 = vmatpush1.msra.mxu0 0.0
    %176 = vmatprep.subr.mxu0 0.0
    %177 = vmatpush1.msra.mxu0 0.0
    %178 = vmatprep.subr.mxu0 0.0
    %179 = vmatpush1.msra.mxu0 0.0
    %180 = vmatprep.subr.mxu0 0.0
    %181 = vmatpush1.msra.mxu0 0.0
    %182 = vmatprep.subr.mxu0 0.0
    %183 = vmatpush1.msra.mxu0 0.0
    %184 = vmatprep.subr.mxu0 0.0
    %185 = vmatpush1.msra.mxu0 0.0
    %186 = vmatprep.subr.mxu0 0.0
    %187 = vmatpush1.msra.mxu0 0.0
    %188 = vmatprep.subr.mxu0 0.0
    %189 = vmatpush1.msra.mxu0 0.0
    %190 = vmatprep.subr.mxu0 0.0
    %191 = vmatpush1.msra.mxu0 0.0
    %192 = vmatprep.subr.mxu0 0.0
    %193 = vmatpush1.msra.mxu0 0.0
    %194 = vmatprep.subr.mxu0 0.0
    %195 = vmatpush1.msra.mxu0 0.0
    %196 = vmatprep.subr.mxu0 0.0
    %197 = vmatpush1.msra.mxu0 0.0
    %198 = vmatprep.subr.mxu0 0.0
    %199 = vmatpush1.msra.mxu0 0.0
    %200 = vmatprep.subr.mxu0 0.0
    %201 = vmatpush1.msra.mxu0 0.0
    %202 = vmatprep.subr.mxu0 0.0
    %203 = vmatpush1.msra.mxu0 0.0
    %204 = vmatprep.subr.mxu0 0.0
    %205 = vmatpush1.msra.mxu0 0.0
    %206 = vmatprep.subr.mxu0 0.0
    %207 = vmatpush1.msra.mxu0 0.0
    %208 = vmatprep.subr.mxu0 0.0
    %209 = vmatpush1.msra.mxu0 0.0
    %210 = vmatprep.subr.mxu0 0.0
    %211 = vmatpush1.msra.mxu0 0.0
    %212 = vmatprep.subr.mxu0 0.0
    %213 = vmatpush1.msra.mxu0 0.0
    %214 = vmatprep.subr.mxu0 0.0
    %215 = vmatpush1.msra.mxu0 0.0
    %216 = vmatprep.subr.mxu0 0.0
    %217 = vmatpush1.msra.mxu0 0.0
    %218 = vmatprep.subr.mxu0 0.0
    %219 = vmatpush1.msra.mxu0 0.0
    %220 = vmatprep.subr.mxu0 0.0
    %221 = vmatpush1.msra.mxu0 0.0
    %222 = vmatprep.subr.mxu0 0.0
    %223 = vmatpush1.msra.mxu0 0.0
    %224 = vmatprep.subr.mxu0 0.0
    %225 = vmatpush1.msra.mxu0 0.0
    %226 = vmatprep.subr.mxu0 0.0
    %227 = vmatpush1.msra.mxu0 0.0
    %228 = vmatprep.subr.mxu0 0.0
    %229 = vmatpush1.msra.mxu0 0.0
    %230 = vmatprep.subr.mxu0 0.0
    %231 = vmatpush1.msra.mxu0 0.0
    %232 = vmatprep.mubr.f32.mxu0 0.0
    %233 = vmatmul.mubr.f32.gmra.mrb[0].mxu0 %v163
    %v234 = vpop.f32.mrb[0].mxu0
    %v235 = vadd.f32 0.0, %v234
    %v236 = vpop.f32.mrb[0].mxu0
    %237 = vmatprep.mubr.f32.mxu0 0.0
    %238 = vmatmul.mubr.f32.gmra.mrb[0].mxu0 %v166
    %v239 = vpop.f32.mrb[0].mxu0
    %v240 = vadd.f32 0.0, %v239
    %v241 = vpop.f32.mrb[0].mxu0
    %242 = vdwg.mxu0
    %243 = vst.msk [vmem:[#allocation8] sm:$0xff] %vm64, %v235
    %244 = vst.msk [vmem:[#allocation8 + $0x8] sm:$0xff] %vm64, %v240
    %245 = vmatprep.subr.mxu0 0.0
    %246 = vmatpush1.msra.mxu0 %v154
    %247 = vmatprep.subr.mxu0 0.0
    %248 = vmatpush1.msra.mxu0 %v159
    %249 = vmatprep.subr.mxu0 0.0
    %250 = vmatpush1.msra.mxu0 0.0
    %251 = vmatprep.subr.mxu0 0.0
    %252 = vmatpush1.msra.mxu0 0.0
    %253 = vmatprep.subr.mxu0 0.0
    %254 = vmatpush1.msra.mxu0 0.0
    %255 = vmatprep.subr.mxu0 0.0
    %256 = vmatpush1.msra.mxu0 0.0
    %257 = vmatprep.subr.mxu0 0.0
    %258 = vmatpush1.msra.mxu0 0.0
    %259 = vmatprep.subr.mxu0 0.0
    %260 = vmatpush1.msra.mxu0 0.0
    %261 = vmatprep.subr.mxu0 0.0
    %262 = vmatpush1.msra.mxu0 0.0
    %263 = vmatprep.subr.mxu0 0.0
    %264 = vmatpush1.msra.mxu0 0.0
    %265 = vmatprep.subr.mxu0 0.0
    %266 = vmatpush1.msra.mxu0 0.0
    %267 = vmatprep.subr.mxu0 0.0
    %268 = vmatpush1.msra.mxu0 0.0
    %269 = vmatprep.subr.mxu0 0.0
    %270 = vmatpush1.msra.mxu0 0.0
    %271 = vmatprep.subr.mxu0 0.0
    %272 = vmatpush1.msra.mxu0 0.0
    %273 = vmatprep.subr.mxu0 0.0
    %274 = vmatpush1.msra.mxu0 0.0
    %275 = vmatprep.subr.mxu0 0.0
    %276 = vmatpush1.msra.mxu0 0.0
    %277 = vmatprep.subr.mxu0 0.0
    %278 = vmatpush1.msra.mxu0 0.0
    %279 = vmatprep.subr.mxu0 0.0
    %280 = vmatpush1.msra.mxu0 0.0
    %281 = vmatprep.subr.mxu0 0.0
    %282 = vmatpush1.msra.mxu0 0.0
    %283 = vmatprep.subr.mxu0 0.0
    %284 = vmatpush1.msra.mxu0 0.0
    %285 = vmatprep.subr.mxu0 0.0
    %286 = vmatpush1.msra.mxu0 0.0
    %287 = vmatprep.subr.mxu0 0.0
    %288 = vmatpush1.msra.mxu0 0.0
    %289 = vmatprep.subr.mxu0 0.0
    %290 = vmatpush1.msra.mxu0 0.0
    %291 = vmatprep.subr.mxu0 0.0
    %292 = vmatpush1.msra.mxu0 0.0
    %293 = vmatprep.subr.mxu0 0.0
    %294 = vmatpush1.msra.mxu0 0.0
    %295 = vmatprep.subr.mxu0 0.0
    %296 = vmatpush1.msra.mxu0 0.0
    %297 = vmatprep.subr.mxu0 0.0
    %298 = vmatpush1.msra.mxu0 0.0
    %299 = vmatprep.subr.mxu0 0.0
    %300 = vmatpush1.msra.mxu0 0.0
    %301 = vmatprep.subr.mxu0 0.0
    %302 = vmatpush1.msra.mxu0 0.0
    %303 = vmatprep.subr.mxu0 0.0
    %304 = vmatpush1.msra.mxu0 0.0
    %305 = vmatprep.subr.mxu0 0.0
    %306 = vmatpush1.msra.mxu0 0.0
    %307 = vmatprep.subr.mxu0 0.0
    %308 = vmatpush1.msra.mxu0 0.0
    %309 = vmatprep.mubr.f32.mxu0 0.0
    %310 = vmatmul.mubr.f32.gmra.mrb[0].mxu0 %v163
    %v311 = vpop.f32.mrb[0].mxu0
    %v312 = vadd.f32 0.0, %v311
    %v313 = vpop.f32.mrb[0].mxu0
    %314 = vmatprep.mubr.f32.mxu0 0.0
    %315 = vmatmul.mubr.f32.gmra.mrb[0].mxu0 %v166
    %v316 = vpop.f32.mrb[0].mxu0
    %v317 = vadd.f32 0.0, %v316
    %v318 = vpop.f32.mrb[0].mxu0
    %319 = vdwg.mxu0
    %s320 = scalar_lea.vmem [#allocation8], 16
    %321 = vst.msk [vmem:[%s320] sm:$0xff] %vm64, %v312
    %322 = vst.msk [vmem:[%s320 + $0x8] sm:$0xff] %vm64, %v317
    // Predicated region
    $region26: #{tpu_custom_call.1} parent=1 // pred_check
      _
    $region27: #{tpu_custom_call.1} parent=1 // pred_check_branch
      %324 = sbr.rel (0) target = $region29
    $region28: #{tpu_custom_call.1} parent=1 // pred_region
      %s326 = ssub.s32 512, 512
      %327 = vsyncadd [#allocation4], %s326
      %s328 = sshll.u32 [#allocation8], 4
      %s329 = int_to_ptr.vmem [resolvable:$true] %s328
      %334 = dma.vmem_to_hbm [thread:$0]  %s329, 512, %s3, [#allocation4], 128, 128, 8
    $region29: #{tpu_custom_call.1} parent=1 // pred_fallthru
      _
    // Predicated region
    $region30: #{tpu_custom_call.1} parent=1 // pred_check
      _
    $region31: #{tpu_custom_call.1} parent=1 // pred_check_branch
      %336 = sbr.rel (0) target = $region33
    $region32: #{tpu_custom_call.1} parent=1 // pred_region
      %337 = dma.done [#allocation4], 512
    $region33: #{tpu_custom_call.1} parent=1 // pred_fallthru
      _
    %338 = vsyncpa [#allocation3], 1
    %339 = vsyncpa [#allocation6], 1
    %340 = vsyncpa [#allocation4], 1

</llo_original>
